<compile_context>
chip_gen: v7x
topology: tpu7x:2x2x1
jax: 0.10.0
libtpu: 0.0.40
codegen_flags: <defaults>
</compile_context>

<pallas_src>
import jax
import jax.numpy as jnp
from jax.experimental import pallas as pl
from jax.experimental.pallas import tpu as pltpu


def _round_up(x, m):
    return (x + m - 1) // m * m


def decoder_attn_kernel(enc_ref, h_ref, wa_ref, wfcih_ref, bfcih_ref,
                        whh_ref, bhh_ref, wout_ref, bout_ref, out_ref):
    # ---- attention: softmax(enc_out @ w_attn) over the sequence axis --------
    enc = enc_ref[...].astype(jnp.float32)                    # (Bt, S, E)
    wa = wa_ref[...]                                          # (1, E) f32
    scores = jnp.sum(enc * wa[None, :, :], axis=-1)           # (Bt, S)
    # b_attn omitted: identical shift per row, cancelled by softmax.
    scores = scores - jnp.max(scores, axis=-1, keepdims=True)
    p = jnp.exp(scores)
    inv = pl.reciprocal(jnp.sum(p, axis=-1, keepdims=True), approx=True)
    a = p * inv                                               # (Bt, S)

    # ---- context: c = bmm(a.unsqueeze(1), enc_out).squeeze(1) ----------------
    c = jnp.sum(a[:, :, None] * enc, axis=1)                  # (Bt, E) f32

    # ---- fused small GEMM: [h_in ; c] @ [w_fc | w_ih] ------------------------
    h_in = h_ref[...]                                         # (Bt, E) bf16
    Bt = h_in.shape[0]
    D = whh_ref.shape[0]
    lhs = jnp.concatenate([h_in, c.astype(h_in.dtype)], axis=0)   # (2Bt, E) bf16
    g_all = jnp.dot(lhs, wfcih_ref[...],
                    preferred_element_type=jnp.float32) + bfcih_ref[...]  # (2Bt, 4D)

    # self.fc: tanh(Linear(enc_size -> dec_size)) applied to the initial hidden
    h0 = jnp.tanh(g_all[:Bt, :D])                             # (Bt, D)
    # GRU input gates (from context c), PyTorch order [r | z | n]
    gi = g_all[Bt:, D:]                                       # (Bt, 3D)

    gh = jnp.dot(h0.astype(whh_ref.dtype), whh_ref[...],
                 preferred_element_type=jnp.float32) + bhh_ref[...]       # (Bt, 3D)

    i_r, i_z, i_n = gi[:, :D], gi[:, D:2 * D], gi[:, 2 * D:]
    h_r, h_z, h_n = gh[:, :D], gh[:, D:2 * D], gh[:, 2 * D:]
    r = jax.nn.sigmoid(i_r + h_r)
    z = jax.nn.sigmoid(i_z + h_z)
    n = jnp.tanh(i_n + r * h_n)
    h1 = (1.0 - z) * n + z * h0                               # (Bt, D)

    # ---- fc_out: Linear(dec_size -> future_step), padded to 128 lanes --------
    out_ref[...] = (jnp.dot(h1.astype(wout_ref.dtype), wout_ref[...],
                            preferred_element_type=jnp.float32)
                    + bout_ref[...])                          # (Bt, F_pad)


def decoder_attn(enc_out, dec_h, params):
    """enc_out: (B, S, E) f32, dec_h: (B, E) f32 -> pred (B, future_step) f32."""
    B, S, E = enc_out.shape
    D = params["w_fc"].shape[1]
    F = params["w_out"].shape[1]
    F_pad = _round_up(F, 128)

    # bf16 operands (MXU inputs / the only large HBM array); f32 biases.
    enc_bf = enc_out.astype(jnp.bfloat16)
    h_bf = dec_h.astype(jnp.bfloat16)
    w_attn = params["w_attn"].astype(jnp.float32)                       # (1, E)
    w_fcih = jnp.concatenate([params["w_fc"], params["w_ih"]],
                             axis=1).astype(jnp.bfloat16)               # (E, 4D)
    b_fcih = jnp.concatenate([params["b_fc"], params["b_ih"]],
                             axis=1).astype(jnp.float32)                # (1, 4D)
    w_hh = params["w_hh"].astype(jnp.bfloat16)                          # (D, 3D)
    b_hh = params["b_hh"].astype(jnp.float32)                           # (1, 3D)
    w_out = jnp.pad(params["w_out"],
                    ((0, 0), (0, F_pad - F))).astype(jnp.bfloat16)      # (D, F_pad)
    b_out = jnp.pad(params["b_out"],
                    ((0, 0), (0, F_pad - F))).astype(jnp.float32)       # (1, F_pad)
    # params["b_attn"] is intentionally not passed (softmax shift-invariance).

    # Batch tiling: keep the bf16 enc tile <= ~8 MiB (double-buffered, fits the
    # v7x 64 MiB VMEM with headroom), B_TILE a multiple of 8, capped at 1024.
    bytes_per_row = S * E * 2
    cap = max(8, min(1024, (8 * 1024 * 1024 // max(1, bytes_per_row)) // 8 * 8))
    B_TILE = min(cap, _round_up(B, 8))
    B_pad = _round_up(B, B_TILE)
    if B_pad != B:
        enc_bf = jnp.pad(enc_bf, ((0, B_pad - B), (0, 0), (0, 0)))
        h_bf = jnp.pad(h_bf, ((0, B_pad - B), (0, 0)))

    const2 = lambda i: (0, 0)
    out = pl.pallas_call(
        decoder_attn_kernel,
        out_shape=jax.ShapeDtypeStruct((B_pad, F_pad), jnp.float32),
        grid=(B_pad // B_TILE,),
        in_specs=[
            pl.BlockSpec((B_TILE, S, E), lambda i: (i, 0, 0)),   # enc_out tile
            pl.BlockSpec((B_TILE, E), lambda i: (i, 0)),         # dec_h tile
            pl.BlockSpec(w_attn.shape, const2),                  # resident weights
            pl.BlockSpec(w_fcih.shape, const2),
            pl.BlockSpec(b_fcih.shape, const2),
            pl.BlockSpec(w_hh.shape, const2),
            pl.BlockSpec(b_hh.shape, const2),
            pl.BlockSpec(w_out.shape, const2),
            pl.BlockSpec(b_out.shape, const2),
        ],
        out_specs=pl.BlockSpec((B_TILE, F_pad), lambda i: (i, 0)),
        compiler_params=pltpu.CompilerParams(
            dimension_semantics=("parallel",),
            vmem_limit_bytes=32 * 1024 * 1024),
    )(enc_bf, h_bf, w_attn, w_fcih, b_fcih, w_hh, b_hh, w_out, b_out)
    return out[:B, :F]


def reference(enc_out, dec_h, p):
    """Pure-JAX f32 reference matching the PyTorch semantics."""
    scores = jnp.einsum('bse,e->bs', enc_out, p["w_attn"][0]) + p["b_attn"][0, 0]
    a = jax.nn.softmax(scores, axis=-1)
    c = jnp.einsum('bs,bse->be', a, enc_out)
    h0 = jnp.tanh(dec_h @ p["w_fc"] + p["b_fc"])
    gi = c @ p["w_ih"] + p["b_ih"]
    gh = h0 @ p["w_hh"] + p["b_hh"]
    D = h0.shape[-1]
    r = jax.nn.sigmoid(gi[:, :D] + gh[:, :D])
    z = jax.nn.sigmoid(gi[:, D:2 * D] + gh[:, D:2 * D])
    n = jnp.tanh(gi[:, 2 * D:] + r * gh[:, 2 * D:])
    h1 = (1.0 - z) * n + z * h0
    return h1 @ p["w_out"] + p["b_out"]


if __name__ == "__main__":
    # Small shapes consistent with the module:
    B, S = 2, 8            # batch, encoder sequence length
    E, D, F = 32, 32, 4    # enc_size, dec_size, future_step

    key = jax.random.PRNGKey(0)
    keys = jax.random.split(key, 14)

    enc_out = jax.random.normal(keys[0], (B, S, E), jnp.float32)
    dec_h = jax.random.normal(keys[1], (B, E), jnp.float32)   # GRU h0, layer dim squeezed

    s = 0.1
    params = {
        # attention scorer: Linear(enc_size, 1) + softmax over seq
        "w_attn": s * jax.random.normal(keys[2], (1, E), jnp.float32),
        "b_attn": s * jax.random.normal(keys[3], (1, 1), jnp.float32),
        # self.fc: Linear(enc_size, dec_size) (+ tanh)
        "w_fc": s * jax.random.normal(keys[4], (E, D), jnp.float32),
        "b_fc": s * jax.random.normal(keys[5], (1, D), jnp.float32),
        # GRU weights, PyTorch gate order [r | z | n], stored (in, 3*dec_size)
        "w_ih": s * jax.random.normal(keys[6], (E, 3 * D), jnp.float32),
        "w_hh": s * jax.random.normal(keys[7], (D, 3 * D), jnp.float32),
        "b_ih": s * jax.random.normal(keys[8], (1, 3 * D), jnp.float32),
        "b_hh": s * jax.random.normal(keys[9], (1, 3 * D), jnp.float32),
        # fc_out: Linear(dec_size, future_step)
        "w_out": s * jax.random.normal(keys[10], (D, F), jnp.float32),
        "b_out": s * jax.random.normal(keys[11], (1, F), jnp.float32),
    }

    pred = decoder_attn(enc_out, dec_h, params)
    pred = jax.block_until_ready(pred)

    ref = reference(enc_out, dec_h, params)
    assert pred.shape == (B, F)
    # bf16 matmul operands (f32 accumulation) -> relaxed tolerance vs f32 ref.
    assert jnp.allclose(pred, ref, atol=2e-2, rtol=2e-2), "mismatch vs reference"

    print("KERNEL_OK")
</pallas_src>

<mosaic_0001>
module attributes {stable_mosaic.version = 11 : i64} {
  func.func @decoder_attn_kernel(%arg0: i32, %arg1: memref<8x8x32xbf16, #tpu.memory_space<vmem>>, %arg2: memref<8x32xbf16, #tpu.memory_space<vmem>>, %arg3: memref<1x32xf32, #tpu.memory_space<vmem>>, %arg4: memref<32x128xbf16, #tpu.memory_space<vmem>>, %arg5: memref<1x128xf32, #tpu.memory_space<vmem>>, %arg6: memref<32x96xbf16, #tpu.memory_space<vmem>>, %arg7: memref<1x96xf32, #tpu.memory_space<vmem>>, %arg8: memref<32x128xbf16, #tpu.memory_space<vmem>>, %arg9: memref<1x128xf32, #tpu.memory_space<vmem>>, %arg10: memref<8x128xf32, #tpu.memory_space<vmem>>) attributes {dimension_semantics = [#tpu.dimension_semantics<parallel>], iteration_bounds = array<i64: 1>, scalar_prefetch = 0 : i64, scratch_operands = 0 : i64, tpu.core_type = #tpu.core_type<tc>, window_params = [{transform_indices = @transform_0, window_bounds = array<i64: 8, 8, 32>}, {transform_indices = @transform_1, window_bounds = array<i64: 8, 32>}, {pipeline_mode = #tpu.pipeline_mode<synchronous>, transform_indices = @transform_2, window_bounds = array<i64: 1, 32>}, {pipeline_mode = #tpu.pipeline_mode<synchronous>, transform_indices = @transform_3, window_bounds = array<i64: 32, 128>}, {pipeline_mode = #tpu.pipeline_mode<synchronous>, transform_indices = @transform_4, window_bounds = array<i64: 1, 128>}, {pipeline_mode = #tpu.pipeline_mode<synchronous>, transform_indices = @transform_5, window_bounds = array<i64: 32, 96>}, {pipeline_mode = #tpu.pipeline_mode<synchronous>, transform_indices = @transform_6, window_bounds = array<i64: 1, 96>}, {pipeline_mode = #tpu.pipeline_mode<synchronous>, transform_indices = @transform_7, window_bounds = array<i64: 32, 128>}, {pipeline_mode = #tpu.pipeline_mode<synchronous>, transform_indices = @transform_8, window_bounds = array<i64: 1, 128>}, {transform_indices = @transform_9, window_bounds = array<i64: 8, 128>}]} {
    %c0 = arith.constant 0 : index
    %c0_0 = arith.constant 0 : index
    %c0_1 = arith.constant 0 : index
    %0 = vector.load %arg1[%c0, %c0_0, %c0_1] : memref<8x8x32xbf16, #tpu.memory_space<vmem>>, vector<8x8x32xbf16>
    %1 = arith.extf %0 : vector<8x8x32xbf16> to vector<8x8x32xf32>
    %c0_2 = arith.constant 0 : index
    %c0_3 = arith.constant 0 : index
    %2 = vector.load %arg3[%c0_2, %c0_3] : memref<1x32xf32, #tpu.memory_space<vmem>>, vector<1x32xf32>
    %3 = vector.shape_cast %2 : vector<1x32xf32> to vector<1x1x32xf32>
    %4 = vector.broadcast %3 : vector<1x1x32xf32> to vector<8x8x32xf32>
    %5 = arith.mulf %1, %4 : vector<8x8x32xf32>
    %cst = arith.constant dense<0.000000e+00> : vector<8x8xf32>
    %6 = vector.multi_reduction <add>, %5, %cst [2] : vector<8x8x32xf32> to vector<8x8xf32>
    %cst_4 = arith.constant dense<0xFF800000> : vector<8xf32>
    %7 = vector.multi_reduction <maximumf>, %6, %cst_4 [1] : vector<8x8xf32> to vector<8xf32>
    %8 = vector.shape_cast %7 : vector<8xf32> to vector<8x1xf32>
    %9 = vector.broadcast %8 : vector<8x1xf32> to vector<8x8xf32>
    %10 = arith.subf %6, %9 : vector<8x8xf32>
    %11 = math.exp %10 : vector<8x8xf32>
    %cst_5 = arith.constant dense<0.000000e+00> : vector<8xf32>
    %12 = vector.multi_reduction <add>, %11, %cst_5 [1] : vector<8x8xf32> to vector<8xf32>
    %13 = vector.shape_cast %12 : vector<8xf32> to vector<8x1xf32>
    %14 = tpu.reciprocal %13 {approx = true} : vector<8x1xf32> -> vector<8x1xf32>
    %15 = vector.broadcast %14 : vector<8x1xf32> to vector<8x8xf32>
    %16 = arith.mulf %11, %15 : vector<8x8xf32>
    %17 = vector.shape_cast %16 : vector<8x8xf32> to vector<8x8x1xf32>
    %18 = vector.broadcast %17 : vector<8x8x1xf32> to vector<8x8x32xf32>
    %19 = arith.mulf %18, %1 : vector<8x8x32xf32>
    %cst_6 = arith.constant dense<0.000000e+00> : vector<8x32xf32>
    %20 = vector.multi_reduction <add>, %19, %cst_6 [1] : vector<8x8x32xf32> to vector<8x32xf32>
    %c0_7 = arith.constant 0 : index
    %c0_8 = arith.constant 0 : index
    %21 = vector.load %arg2[%c0_7, %c0_8] : memref<8x32xbf16, #tpu.memory_space<vmem>>, vector<8x32xbf16>
    %22 = arith.truncf %20 : vector<8x32xf32> to vector<8x32xbf16>
    %23 = tpu.concatenate %21, %22 in 0 : vector<8x32xbf16>, vector<8x32xbf16> -> vector<16x32xbf16>
    %c0_9 = arith.constant 0 : index
    %c0_10 = arith.constant 0 : index
    %24 = vector.load %arg4[%c0_9, %c0_10] : memref<32x128xbf16, #tpu.memory_space<vmem>>, vector<32x128xbf16>
    %cst_11 = arith.constant dense<0.000000e+00> : vector<16x128xf32>
    %25 = tpu.matmul %23, %24, %cst_11 {dimension_numbers = #tpu.dot_dimension_numbers<[1], [0], [0], [1], [0, 0, 1, 1], [], []>} : vector<16x32xbf16>, vector<32x128xbf16>, vector<16x128xf32> -> vector<16x128xf32>
    %c0_12 = arith.constant 0 : index
    %c0_13 = arith.constant 0 : index
    %26 = vector.load %arg5[%c0_12, %c0_13] : memref<1x128xf32, #tpu.memory_space<vmem>>, vector<1x128xf32>
    %27 = vector.broadcast %26 : vector<1x128xf32> to vector<16x128xf32>
    %28 = arith.addf %25, %27 : vector<16x128xf32>
    %29 = vector.extract_strided_slice %28 {offsets = [0, 0], sizes = [8, 32], strides = [1, 1]} : vector<16x128xf32> to vector<8x32xf32>
    %30 = math.tanh %29 : vector<8x32xf32>
    %31 = vector.extract_strided_slice %28 {offsets = [8, 32], sizes = [8, 96], strides = [1, 1]} : vector<16x128xf32> to vector<8x96xf32>
    %32 = arith.truncf %30 : vector<8x32xf32> to vector<8x32xbf16>
    %c0_14 = arith.constant 0 : index
    %c0_15 = arith.constant 0 : index
    %33 = vector.load %arg6[%c0_14, %c0_15] : memref<32x96xbf16, #tpu.memory_space<vmem>>, vector<32x96xbf16>
    %cst_16 = arith.constant dense<0.000000e+00> : vector<8x96xf32>
    %34 = tpu.matmul %32, %33, %cst_16 {dimension_numbers = #tpu.dot_dimension_numbers<[1], [0], [0], [1], [0, 0, 1, 1], [], []>} : vector<8x32xbf16>, vector<32x96xbf16>, vector<8x96xf32> -> vector<8x96xf32>
    %c0_17 = arith.constant 0 : index
    %c0_18 = arith.constant 0 : index
    %35 = vector.load %arg7[%c0_17, %c0_18] : memref<1x96xf32, #tpu.memory_space<vmem>>, vector<1x96xf32>
    %36 = vector.broadcast %35 : vector<1x96xf32> to vector<8x96xf32>
    %37 = arith.addf %34, %36 : vector<8x96xf32>
    %38 = vector.extract_strided_slice %31 {offsets = [0, 0], sizes = [8, 32], strides = [1, 1]} : vector<8x96xf32> to vector<8x32xf32>
    %39 = vector.extract_strided_slice %31 {offsets = [0, 32], sizes = [8, 32], strides = [1, 1]} : vector<8x96xf32> to vector<8x32xf32>
    %40 = vector.extract_strided_slice %31 {offsets = [0, 64], sizes = [8, 32], strides = [1, 1]} : vector<8x96xf32> to vector<8x32xf32>
    %41 = vector.extract_strided_slice %37 {offsets = [0, 0], sizes = [8, 32], strides = [1, 1]} : vector<8x96xf32> to vector<8x32xf32>
    %42 = vector.extract_strided_slice %37 {offsets = [0, 32], sizes = [8, 32], strides = [1, 1]} : vector<8x96xf32> to vector<8x32xf32>
    %43 = vector.extract_strided_slice %37 {offsets = [0, 64], sizes = [8, 32], strides = [1, 1]} : vector<8x96xf32> to vector<8x32xf32>
    %44 = arith.addf %38, %41 : vector<8x32xf32>
    %45 = arith.negf %44 : vector<8x32xf32>
    %46 = math.exp %45 : vector<8x32xf32>
    %cst_19 = arith.constant 1.000000e+00 : f32
    %47 = vector.broadcast %cst_19 : f32 to vector<8x32xf32>
    %48 = arith.addf %47, %46 : vector<8x32xf32>
    %49 = arith.divf %47, %48 : vector<8x32xf32>
    %50 = arith.addf %39, %42 : vector<8x32xf32>
    %51 = arith.negf %50 : vector<8x32xf32>
    %52 = math.exp %51 : vector<8x32xf32>
    %cst_20 = arith.constant 1.000000e+00 : f32
    %53 = vector.broadcast %cst_20 : f32 to vector<8x32xf32>
    %54 = arith.addf %53, %52 : vector<8x32xf32>
    %55 = arith.divf %53, %54 : vector<8x32xf32>
    %56 = arith.mulf %49, %43 : vector<8x32xf32>
    %57 = arith.addf %40, %56 : vector<8x32xf32>
    %58 = math.tanh %57 : vector<8x32xf32>
    %cst_21 = arith.constant 1.000000e+00 : f32
    %59 = vector.broadcast %cst_21 : f32 to vector<8x32xf32>
    %60 = arith.subf %59, %55 : vector<8x32xf32>
    %61 = arith.mulf %60, %58 : vector<8x32xf32>
    %62 = arith.mulf %55, %30 : vector<8x32xf32>
    %63 = arith.addf %61, %62 : vector<8x32xf32>
    %64 = arith.truncf %63 : vector<8x32xf32> to vector<8x32xbf16>
    %c0_22 = arith.constant 0 : index
    %c0_23 = arith.constant 0 : index
    %65 = vector.load %arg8[%c0_22, %c0_23] : memref<32x128xbf16, #tpu.memory_space<vmem>>, vector<32x128xbf16>
    %cst_24 = arith.constant dense<0.000000e+00> : vector<8x128xf32>
    %66 = tpu.matmul %64, %65, %cst_24 {dimension_numbers = #tpu.dot_dimension_numbers<[1], [0], [0], [1], [0, 0, 1, 1], [], []>} : vector<8x32xbf16>, vector<32x128xbf16>, vector<8x128xf32> -> vector<8x128xf32>
    %c0_25 = arith.constant 0 : index
    %c0_26 = arith.constant 0 : index
    %67 = vector.load %arg9[%c0_25, %c0_26] : memref<1x128xf32, #tpu.memory_space<vmem>>, vector<1x128xf32>
    %68 = vector.broadcast %67 : vector<1x128xf32> to vector<8x128xf32>
    %69 = arith.addf %66, %68 : vector<8x128xf32>
    %c0_27 = arith.constant 0 : index
    %c0_28 = arith.constant 0 : index
    %70 = vector.load %arg10[%c0_27, %c0_28] : memref<8x128xf32, #tpu.memory_space<vmem>>, vector<8x128xf32>
    tpu.vector_store %arg10[%c0_27, %c0_28], %69 {strides = array<i32>} : memref<8x128xf32, #tpu.memory_space<vmem>>, vector<8x128xf32>,
    return
  }
  func.func @transform_0(%arg0: i32) -> (i32, i32, i32) {
    %c0_i32 = arith.constant 0 : i32
    %c0_i32_0 = arith.constant 0 : i32
    %c0_i32_1 = arith.constant 0 : i32
    return %arg0, %c0_i32, %c0_i32_0 : i32, i32, i32
  }
  func.func @transform_1(%arg0: i32) -> (i32, i32) {
    %c0_i32 = arith.constant 0 : i32
    %c0_i32_0 = arith.constant 0 : i32
    return %arg0, %c0_i32 : i32, i32
  }
  func.func @transform_2(%arg0: i32) -> (i32, i32) {
    %c0_i32 = arith.constant 0 : i32
    %c0_i32_0 = arith.constant 0 : i32
    %c0_i32_1 = arith.constant 0 : i32
    return %c0_i32, %c0_i32_0 : i32, i32
  }
  func.func @transform_3(%arg0: i32) -> (i32, i32) {
    %c0_i32 = arith.constant 0 : i32
    %c0_i32_0 = arith.constant 0 : i32
    %c0_i32_1 = arith.constant 0 : i32
    return %c0_i32, %c0_i32_0 : i32, i32
  }
  func.func @transform_4(%arg0: i32) -> (i32, i32) {
    %c0_i32 = arith.constant 0 : i32
    %c0_i32_0 = arith.constant 0 : i32
    %c0_i32_1 = arith.constant 0 : i32
    return %c0_i32, %c0_i32_0 : i32, i32
  }
  func.func @transform_5(%arg0: i32) -> (i32, i32) {
    %c0_i32 = arith.constant 0 : i32
    %c0_i32_0 = arith.constant 0 : i32
    %c0_i32_1 = arith.constant 0 : i32
    return %c0_i32, %c0_i32_0 : i32, i32
  }
  func.func @transform_6(%arg0: i32) -> (i32, i32) {
    %c0_i32 = arith.constant 0 : i32
    %c0_i32_0 = arith.constant 0 : i32
    %c0_i32_1 = arith.constant 0 : i32
    return %c0_i32, %c0_i32_0 : i32, i32
  }
  func.func @transform_7(%arg0: i32) -> (i32, i32) {
    %c0_i32 = arith.constant 0 : i32
    %c0_i32_0 = arith.constant 0 : i32
    %c0_i32_1 = arith.constant 0 : i32
    return %c0_i32, %c0_i32_0 : i32, i32
  }
  func.func @transform_8(%arg0: i32) -> (i32, i32) {
    %c0_i32 = arith.constant 0 : i32
    %c0_i32_0 = arith.constant 0 : i32
    %c0_i32_1 = arith.constant 0 : i32
    return %c0_i32, %c0_i32_0 : i32, i32
  }
  func.func @transform_9(%arg0: i32) -> (i32, i32) {
    %c0_i32 = arith.constant 0 : i32
    %c0_i32_0 = arith.constant 0 : i32
    return %arg0, %c0_i32 : i32, i32
  }
}

</mosaic_0001>

<llo_original>
// kernel: tpu_custom_call.1
$region0: #{tpu_custom_call.1}
  #allocation0 [shape = 'u32[]', space=smem, size = 0x4, offset = 0x4, fixed_abs, tag = 'smem constant byte address 0x4 - core index']
  #allocation1 [shape = 'u32[144,128]{1,0:T(1,128)}', space=vmem, size = 0x12000, scoped, tag = 'internal scratch']
  %s0 = inlined_call_operand.hbm [shape: bf16[8,8,32], index: 0, kind: input, shape index: {}]
  %s1 = inlined_call_operand.hbm [shape: bf16[8,32], index: 1, kind: input, shape index: {}]
  %s2 = inlined_call_operand.vmem [shape: f32[1,32], index: 2, kind: input, shape index: {}]
  %s3 = inlined_call_operand.hbm [shape: bf16[32,128], index: 3, kind: input, shape index: {}]
  %s4 = inlined_call_operand.vmem [shape: f32[1,128], index: 4, kind: input, shape index: {}]
  %s5 = inlined_call_operand.vmem [shape: bf16[32,96], index: 5, kind: input, shape index: {}]
  %s6 = inlined_call_operand.vmem [shape: f32[1,96], index: 6, kind: input, shape index: {}]
  %s7 = inlined_call_operand.hbm [shape: bf16[32,128], index: 7, kind: input, shape index: {}]
  %s8 = inlined_call_operand.vmem [shape: f32[1,128], index: 8, kind: input, shape index: {}]
  %s9 = inlined_call_operand.hbm [shape: f32[8,128], index: 9, kind: output, shape index: {}]
  %s10 = sld [smem:[#allocation0]]
  $region62: #{tpu_custom_call.1} parent=0
    _
  %s12 = ssub.s32 1, %s10
  %s13 = scalar_select 0, %s12, %s10
  $region1: #{tpu_custom_call.1} parent=0
    #allocation2 [shape = 'u8[16384]{0}', space=vmem, size = 0x4000, scoped, tag = 'input window, operand 0, single buffered']
    #allocation3 [shape = 's32[1]{0}', space=sflag, size = 0x4, scoped, tag = 'scoped memory for tpu_custom_call.1']
    #allocation4 [shape = 's32[1]{0}', space=sflag, size = 0x4, scoped, tag = 'scoped memory for tpu_custom_call.1']
    #allocation5 [shape = 'u8[2048]{0}', space=vmem, size = 0x800, scoped, tag = 'input window, operand 1, single buffered']
    #allocation6 [shape = 's32[1]{0}', space=sflag, size = 0x4, scoped, tag = 'scoped memory for tpu_custom_call.1']
    #allocation7 [shape = 'u8[8192]{0}', space=vmem, size = 0x2000, scoped, tag = 'input window, operand 3, single buffered']
    #allocation8 [shape = 'u8[8192]{0}', space=vmem, size = 0x2000, scoped, tag = 'input window, operand 7, single buffered']
    #allocation9 [shape = 's32[1]{0}', space=sflag, size = 0x4, scoped, tag = 'scoped memory for tpu_custom_call.1']
    #allocation10 [shape = 'u8[4096]{0}', space=vmem, size = 0x1000, scoped, tag = 'output window, operand 0, single buffered']
    %14 = vsyncpa [#allocation3], 0
    %15 = vsyncpa [#allocation6], 0
    %16 = vsyncpa [#allocation9], 0
    %17 = vsyncpa [#allocation4], 0
    // Predicated region
    $region2: #{tpu_custom_call.1} parent=1 // pred_check
      _
    $region3: #{tpu_custom_call.1} parent=1 // pred_check_branch
      %19 = sbr.rel (0) target = $region5
    $region4: #{tpu_custom_call.1} parent=1 // pred_region
      %s21 = ssub.s32 512, 512
      %22 = vsyncadd [#allocation3], %s21
      %s23 = sshll.u32 [#allocation2], 4
      %s24 = int_to_ptr.vmem [resolvable:$true] %s23
      %29 = dma.hbm_to_vmem [thread:$0]  %s0, 512, %s24, [#allocation3], 64, 64, 4
    $region5: #{tpu_custom_call.1} parent=1 // pred_fallthru
      _
    // Predicated region
    $region6: #{tpu_custom_call.1} parent=1 // pred_check
      _
    $region7: #{tpu_custom_call.1} parent=1 // pred_check_branch
      %31 = sbr.rel (0) target = $region9
    $region8: #{tpu_custom_call.1} parent=1 // pred_region
      %s33 = ssub.s32 64, 64
      %34 = vsyncadd [#allocation6], %s33
      %s36 = sshll.u32 [#allocation5], 4
      %s37 = int_to_ptr.vmem [resolvable:$true] %s36
      %39 = dma.hbm_to_vmem [thread:$0]  %s1, 64, %s37, [#allocation6]
    $region9: #{tpu_custom_call.1} parent=1 // pred_fallthru
      _
    // Predicated region
    $region10: #{tpu_custom_call.1} parent=1 // pred_check
      _
    $region11: #{tpu_custom_call.1} parent=1 // pred_check_branch
      %41 = sbr.rel (0) target = $region13
    $region12: #{tpu_custom_call.1} parent=1 // pred_region
      _
    $region13: #{tpu_custom_call.1} parent=1 // pred_fallthru
      _
    // Predicated region
    $region14: #{tpu_custom_call.1} parent=1 // pred_check
      _
    $region15: #{tpu_custom_call.1} parent=1 // pred_check_branch
      %43 = sbr.rel (0) target = $region17
    $region16: #{tpu_custom_call.1} parent=1 // pred_region
      %s45 = ssub.s32 256, 256
      %46 = vsyncadd [#allocation6], %s45
      %s47 = sshll.u32 [#allocation7], 4
      %s48 = int_to_ptr.vmem [resolvable:$true] %s47
      %53 = dma.hbm_to_vmem [thread:$0]  %s3, 256, %s48, [#allocation6], 64, 64, 4
    $region17: #{tpu_custom_call.1} parent=1 // pred_fallthru
      _
    // Predicated region
    $region18: #{tpu_custom_call.1} parent=1 // pred_check
      _
    $region19: #{tpu_custom_call.1} parent=1 // pred_check_branch
      %55 = sbr.rel (0) target = $region21
    $region20: #{tpu_custom_call.1} parent=1 // pred_region
      _
    $region21: #{tpu_custom_call.1} parent=1 // pred_fallthru
      _
    // Predicated region
    $region22: #{tpu_custom_call.1} parent=1 // pred_check
      _
    $region23: #{tpu_custom_call.1} parent=1 // pred_check_branch
      %57 = sbr.rel (0) target = $region25
    $region24: #{tpu_custom_call.1} parent=1 // pred_region
      _
    $region25: #{tpu_custom_call.1} parent=1 // pred_fallthru
      _
    // Predicated region
    $region26: #{tpu_custom_call.1} parent=1 // pred_check
      _
    $region27: #{tpu_custom_call.1} parent=1 // pred_check_branch
      %59 = sbr.rel (0) target = $region29
    $region28: #{tpu_custom_call.1} parent=1 // pred_region
      _
    $region29: #{tpu_custom_call.1} parent=1 // pred_fallthru
      _
    // Predicated region
    $region30: #{tpu_custom_call.1} parent=1 // pred_check
      _
    $region31: #{tpu_custom_call.1} parent=1 // pred_check_branch
      %61 = sbr.rel (0) target = $region33
    $region32: #{tpu_custom_call.1} parent=1 // pred_region
      %s63 = ssub.s32 256, 256
      %64 = vsyncadd [#allocation9], %s63
      %s65 = sshll.u32 [#allocation8], 4
      %s66 = int_to_ptr.vmem [resolvable:$true] %s65
      %71 = dma.hbm_to_vmem [thread:$0]  %s7, 256, %s66, [#allocation9], 64, 64, 4
    $region33: #{tpu_custom_call.1} parent=1 // pred_fallthru
      _
    // Predicated region
    $region34: #{tpu_custom_call.1} parent=1 // pred_check
      _
    $region35: #{tpu_custom_call.1} parent=1 // pred_check_branch
      %73 = sbr.rel (0) target = $region37
    $region36: #{tpu_custom_call.1} parent=1 // pred_region
      _
    $region37: #{tpu_custom_call.1} parent=1 // pred_fallthru
      _
    // Predicated region
    $region38: #{tpu_custom_call.1} parent=1 // pred_check
      _
    $region39: #{tpu_custom_call.1} parent=1 // pred_check_branch
      %75 = sbr.rel (0) target = $region41
    $region40: #{tpu_custom_call.1} parent=1 // pred_region
      %76 = dma.done [#allocation3], 512
    $region41: #{tpu_custom_call.1} parent=1 // pred_fallthru
      _
    // Predicated region
    $region42: #{tpu_custom_call.1} parent=1 // pred_check
      _
    $region43: #{tpu_custom_call.1} parent=1 // pred_check_branch
      %78 = sbr.rel (0) target = $region45
    $region44: #{tpu_custom_call.1} parent=1 // pred_region
      %79 = dma.done [#allocation6], 64
    $region45: #{tpu_custom_call.1} parent=1 // pred_fallthru
      _
    // Predicated region
    $region46: #{tpu_custom_call.1} parent=1 // pred_check
      _
    $region47: #{tpu_custom_call.1} parent=1 // pred_check_branch
      %81 = sbr.rel (0) target = $region49
    $region48: #{tpu_custom_call.1} parent=1 // pred_region
      %82 = dma.done [#allocation6], 256
    $region49: #{tpu_custom_call.1} parent=1 // pred_fallthru
      _
    // Predicated region
    $region50: #{tpu_custom_call.1} parent=1 // pred_check
      _
    $region51: #{tpu_custom_call.1} parent=1 // pred_check_branch
      %84 = sbr.rel (0) target = $region53
    $region52: #{tpu_custom_call.1} parent=1 // pred_region
      %85 = dma.done [#allocation9], 256
    $region53: #{tpu_custom_call.1} parent=1 // pred_fallthru
      _
    %v87 = vld [vmem:[#allocation2] sm:$0xf]
    %v88 = vld [vmem:[#allocation2 + $0x4] sm:$0xf]
    %v89 = vld [vmem:[#allocation2 + $0x8] sm:$0xf]
    %v90 = vld [vmem:[#allocation2 + $0xc] sm:$0xf]
    %v91 = vld [vmem:[#allocation2 + $0x10] sm:$0xf]
    %v92 = vld [vmem:[#allocation2 + $0x14] sm:$0xf]
    %v93 = vld [vmem:[#allocation2 + $0x18] sm:$0xf]
    %v94 = vld [vmem:[#allocation2 + $0x1c] sm:$0xf]
    %v95 = vunpack.c.l.bf16 %v87
    %v96 = vunpack.c.l.bf16 %v88
    %v97 = vunpack.c.l.bf16 %v89
    %v98 = vunpack.c.l.bf16 %v90
    %v99 = vunpack.c.l.bf16 %v91
    %v100 = vunpack.c.l.bf16 %v92
    %v101 = vunpack.c.l.bf16 %v93
    %v102 = vunpack.c.l.bf16 %v94
    %v103 = vld [vmem:[%s2] sm:$0x1]
    %v105 = vlaneseq
    %v106 = vshrl.u32 %v105, 7
    %v107 = vsub.s32 0, %v106
    %v108 = vrot.slane %v103, %v107
    %v110 = vmul.f32 %v95, %v108
    %v111 = vmul.f32 %v96, %v108
    %v112 = vmul.f32 %v97, %v108
    %v113 = vmul.f32 %v98, %v108
    %v114 = vmul.f32 %v99, %v108
    %v115 = vmul.f32 %v100, %v108
    %v116 = vmul.f32 %v101, %v108
    %v117 = vmul.f32 %v102, %v108
    %vm118 = vcmask 261120
    %v119 = vsel %vm118, %v110, 0.0
    %120 = vadd.xlane.f32.xlu0 %v119
    %v121 = vpop.xlane.xlu0 %120
    %v122 = vsel %vm118, %v111, 0.0
    %123 = vadd.xlane.f32.xlu0 %v122
    %v124 = vpop.xlane.xlu0 %123
    %v125 = vsel %vm118, %v112, 0.0
    %126 = vadd.xlane.f32.xlu0 %v125
    %v127 = vpop.xlane.xlu0 %126
    %v128 = vsel %vm118, %v113, 0.0
    %129 = vadd.xlane.f32.xlu0 %v128
    %v130 = vpop.xlane.xlu0 %129
    %v131 = vsel %vm118, %v114, 0.0
    %132 = vadd.xlane.f32.xlu0 %v131
    %v133 = vpop.xlane.xlu0 %132
    %v134 = vsel %vm118, %v115, 0.0
    %135 = vadd.xlane.f32.xlu0 %v134
    %v136 = vpop.xlane.xlu0 %135
    %v137 = vsel %vm118, %v116, 0.0
    %138 = vadd.xlane.f32.xlu0 %v137
    %v139 = vpop.xlane.xlu0 %138
    %v140 = vsel %vm118, %v117, 0.0
    %141 = vadd.xlane.f32.xlu0 %v140
    %v142 = vpop.xlane.xlu0 %141
    %v151 = vlaneseq
    %v152 = vand.u32 %v151, 127
    %v153 = vlaneseq
    %v154 = vshrl.u32 %v153, 7
    %v155 = vsub.s32 %v152, %v154
    %v156 = vrot.slane %v121, %v155
    %v157 = vlaneseq
    %v158 = vshrl.u32 %v157, 7
    %v159 = vsub.s32 %v152, %v158
    %v160 = vrot.slane %v124, %v159
    %v161 = vlaneseq
    %v162 = vshrl.u32 %v161, 7
    %v163 = vsub.s32 %v152, %v162
    %v164 = vrot.slane %v127, %v163
    %v165 = vlaneseq
    %v166 = vshrl.u32 %v165, 7
    %v167 = vsub.s32 %v152, %v166
    %v168 = vrot.slane %v130, %v167
    %v169 = vlaneseq
    %v170 = vshrl.u32 %v169, 7
    %v171 = vsub.s32 %v152, %v170
    %v172 = vrot.slane %v133, %v171
    %v173 = vlaneseq
    %v174 = vshrl.u32 %v173, 7
    %v175 = vsub.s32 %v152, %v174
    %v176 = vrot.slane %v136, %v175
    %v177 = vlaneseq
    %v178 = vshrl.u32 %v177, 7
    %v179 = vsub.s32 %v152, %v178
    %v180 = vrot.slane %v139, %v179
    %v181 = vlaneseq
    %v182 = vshrl.u32 %v181, 7
    %v183 = vsub.s32 %v152, %v182
    %v184 = vrot.slane %v142, %v183
    %vm185 = vcmask 1041409
    %v186 = vsel %vm185, %v160, %v156
    %vm187 = vcmask 1042434
    %v188 = vsel %vm187, %v164, %v186
    %vm189 = vcmask 1043459
    %v190 = vsel %vm189, %v168, %v188
    %vm191 = vcmask 1044484
    %v192 = vsel %vm191, %v172, %v190
    %vm193 = vcmask 1045509
    %v194 = vsel %vm193, %v176, %v192
    %vm195 = vcmask 1046534
    %v196 = vsel %vm195, %v180, %v194
    %vm197 = vcmask 1047559
    %v198 = vsel %vm197, %v184, %v196
    %vm200 = vcmask 64512
    %v201 = vsel %vm200, %v198, -inf
    %202 = vmax.xlane.f32.xlu0 %v201
    %v203 = vpop.xlane.xlu0 %202
    %v205 = vlaneseq
    %v206 = vshrl.u32 %v205, 7
    %v207 = vsub.s32 0, %v206
    %v208 = vrot.slane %v203, %v207
    %v209 = vlaneseq
    %v210 = vshrl.u32 %v209, 7
    %v211 = vsub.s32 1, %v210
    %v212 = vrot.slane %v203, %v211
    %v213 = vlaneseq
    %v214 = vshrl.u32 %v213, 7
    %v215 = vsub.s32 2, %v214
    %v216 = vrot.slane %v203, %v215
    %v217 = vlaneseq
    %v218 = vshrl.u32 %v217, 7
    %v219 = vsub.s32 3, %v218
    %v220 = vrot.slane %v203, %v219
    %v221 = vlaneseq
    %v222 = vshrl.u32 %v221, 7
    %v223 = vsub.s32 4, %v222
    %v224 = vrot.slane %v203, %v223
    %v225 = vlaneseq
    %v226 = vshrl.u32 %v225, 7
    %v227 = vsub.s32 5, %v226
    %v228 = vrot.slane %v203, %v227
    %v229 = vlaneseq
    %v230 = vshrl.u32 %v229, 7
    %v231 = vsub.s32 6, %v230
    %v232 = vrot.slane %v203, %v231
    %v233 = vlaneseq
    %v234 = vshrl.u32 %v233, 7
    %v235 = vsub.s32 7, %v234
    %v236 = vrot.slane %v203, %v235
    %v245 = vsub.f32 %v121, %v208
    %v246 = vsub.f32 %v124, %v212
    %v247 = vsub.f32 %v127, %v216
    %v248 = vsub.f32 %v130, %v220
    %v249 = vsub.f32 %v133, %v224
    %v250 = vsub.f32 %v136, %v228
    %v251 = vsub.f32 %v139, %v232
    %v252 = vsub.f32 %v142, %v236
    %v253 = vmul.f32 %v245, 1.442695
    %v254 = vpow.pop %v253
    %v255 = vmul.f32 %v246, 1.442695
    %v256 = vpow.pop %v255
    %v257 = vmul.f32 %v247, 1.442695
    %v258 = vpow.pop %v257
    %v259 = vmul.f32 %v248, 1.442695
    %v260 = vpow.pop %v259
    %v261 = vmul.f32 %v249, 1.442695
    %v262 = vpow.pop %v261
    %v263 = vmul.f32 %v250, 1.442695
    %v264 = vpow.pop %v263
    %v265 = vmul.f32 %v251, 1.442695
    %v266 = vpow.pop %v265
    %v267 = vmul.f32 %v252, 1.442695
    %v268 = vpow.pop %v267
    %277 = vset.pattern.permute.xlu0 0
    %278 = vperm.xlu0 %277, %v254
    %v279 = vpop.permute.xlu0 %278
    %280 = vset.pattern.permute.xlu0 0
    %281 = vperm.xlu0 %280, %v256
    %v282 = vpop.permute.xlu0 %281
    %283 = vset.pattern.permute.xlu0 0
    %284 = vperm.xlu0 %283, %v258
    %v285 = vpop.permute.xlu0 %284
    %286 = vset.pattern.permute.xlu0 0
    %287 = vperm.xlu0 %286, %v260
    %v288 = vpop.permute.xlu0 %287
    %289 = vset.pattern.permute.xlu0 0
    %290 = vperm.xlu0 %289, %v262
    %v291 = vpop.permute.xlu0 %290
    %292 = vset.pattern.permute.xlu0 0
    %293 = vperm.xlu0 %292, %v264
    %v294 = vpop.permute.xlu0 %293
    %295 = vset.pattern.permute.xlu0 0
    %296 = vperm.xlu0 %295, %v266
    %v297 = vpop.permute.xlu0 %296
    %298 = vset.pattern.permute.xlu0 0
    %299 = vperm.xlu0 %298, %v268
    %v300 = vpop.permute.xlu0 %299
    %v301 = vlaneseq
    %v302 = vshrl.u32 %v301, 7
    %v303 = vsub.s32 %v152, %v302
    %v304 = vrot.slane %v279, %v303
    %v305 = vlaneseq
    %v306 = vshrl.u32 %v305, 7
    %v307 = vsub.s32 %v152, %v306
    %v308 = vrot.slane %v282, %v307
    %v309 = vlaneseq
    %v310 = vshrl.u32 %v309, 7
    %v311 = vsub.s32 %v152, %v310
    %v312 = vrot.slane %v285, %v311
    %v313 = vlaneseq
    %v314 = vshrl.u32 %v313, 7
    %v315 = vsub.s32 %v152, %v314
    %v316 = vrot.slane %v288, %v315
    %v317 = vlaneseq
    %v318 = vshrl.u32 %v317, 7
    %v319 = vsub.s32 %v152, %v318
    %v320 = vrot.slane %v291, %v319
    %v321 = vlaneseq
    %v322 = vshrl.u32 %v321, 7
    %v323 = vsub.s32 %v152, %v322
    %v324 = vrot.slane %v294, %v323
    %v325 = vlaneseq
    %v326 = vshrl.u32 %v325, 7
    %v327 = vsub.s32 %v152, %v326
    %v328 = vrot.slane %v297, %v327
    %v329 = vlaneseq
    %v330 = vshrl.u32 %v329, 7
    %v331 = vsub.s32 %v152, %v330
    %v332 = vrot.slane %v300, %v331
    %v333 = vsel %vm185, %v308, %v304
    %v334 = vsel %vm187, %v312, %v333
    %v335 = vsel %vm189, %v316, %v334
    %v336 = vsel %vm191, %v320, %v335
    %v337 = vsel %vm193, %v324, %v336
    %v338 = vsel %vm195, %v328, %v337
    %v339 = vsel %vm197, %v332, %v338
    %v341 = vsel %vm200, %v339, 0.0
    %342 = vadd.xlane.f32.xlu0 %v341
    %v343 = vpop.xlane.xlu0 %342
    %v344 = vrcp.pop %v343
    %v346 = vlaneseq
    %v347 = vshrl.u32 %v346, 7
    %v348 = vsub.s32 0, %v347
    %v349 = vrot.slane %v344, %v348
    %v350 = vlaneseq
    %v351 = vshrl.u32 %v350, 7
    %v352 = vsub.s32 1, %v351
    %v353 = vrot.slane %v344, %v352
    %v354 = vlaneseq
    %v355 = vshrl.u32 %v354, 7
    %v356 = vsub.s32 2, %v355
    %v357 = vrot.slane %v344, %v356
    %v358 = vlaneseq
    %v359 = vshrl.u32 %v358, 7
    %v360 = vsub.s32 3, %v359
    %v361 = vrot.slane %v344, %v360
    %v362 = vlaneseq
    %v363 = vshrl.u32 %v362, 7
    %v364 = vsub.s32 4, %v363
    %v365 = vrot.slane %v344, %v364
    %v366 = vlaneseq
    %v367 = vshrl.u32 %v366, 7
    %v368 = vsub.s32 5, %v367
    %v369 = vrot.slane %v344, %v368
    %v370 = vlaneseq
    %v371 = vshrl.u32 %v370, 7
    %v372 = vsub.s32 6, %v371
    %v373 = vrot.slane %v344, %v372
    %v374 = vlaneseq
    %v375 = vshrl.u32 %v374, 7
    %v376 = vsub.s32 7, %v375
    %v377 = vrot.slane %v344, %v376
    %v386 = vmul.f32 %v254, %v349
    %v387 = vmul.f32 %v256, %v353
    %v388 = vmul.f32 %v258, %v357
    %v389 = vmul.f32 %v260, %v361
    %v390 = vmul.f32 %v262, %v365
    %v391 = vmul.f32 %v264, %v369
    %v392 = vmul.f32 %v266, %v373
    %v393 = vmul.f32 %v268, %v377
    %395 = vset.pattern.permute.xlu0 0
    %396 = vperm.xlu0 %395, %v386
    %v397 = vpop.permute.xlu0 %396
    %400 = vset.pattern.permute.xlu0 0
    %401 = vperm.xlu0 %400, %v387
    %v402 = vpop.permute.xlu0 %401
    %405 = vset.pattern.permute.xlu0 0
    %406 = vperm.xlu0 %405, %v388
    %v407 = vpop.permute.xlu0 %406
    %410 = vset.pattern.permute.xlu0 0
    %411 = vperm.xlu0 %410, %v389
    %v412 = vpop.permute.xlu0 %411
    %415 = vset.pattern.permute.xlu0 0
    %416 = vperm.xlu0 %415, %v390
    %v417 = vpop.permute.xlu0 %416
    %420 = vset.pattern.permute.xlu0 0
    %421 = vperm.xlu0 %420, %v391
    %v422 = vpop.permute.xlu0 %421
    %425 = vset.pattern.permute.xlu0 0
    %426 = vperm.xlu0 %425, %v392
    %v427 = vpop.permute.xlu0 %426
    %430 = vset.pattern.permute.xlu0 0
    %431 = vperm.xlu0 %430, %v393
    %v432 = vpop.permute.xlu0 %431
    %v434 = vmul.f32 %v397, %v95
    %v435 = vmul.f32 %v402, %v96
    %v436 = vmul.f32 %v407, %v97
    %v437 = vmul.f32 %v412, %v98
    %v438 = vmul.f32 %v417, %v99
    %v439 = vmul.f32 %v422, %v100
    %v440 = vmul.f32 %v427, %v101
    %v441 = vmul.f32 %v432, %v102
    %v442 = vsel %vm118, %v434, 0.0
    %v443 = vrot.slane %v442, 4
    %v444 = vadd.f32 %v442, %v443
    %v445 = vrot.slane %v444, 2
    %v446 = vadd.f32 %v444, %v445
    %v447 = vrot.slane %v446, 1
    %v448 = vadd.f32 %v446, %v447
    %v449 = vsel %vm118, %v435, 0.0
    %v450 = vrot.slane %v449, 4
    %v451 = vadd.f32 %v449, %v450
    %v452 = vrot.slane %v451, 2
    %v453 = vadd.f32 %v451, %v452
    %v454 = vrot.slane %v453, 1
    %v455 = vadd.f32 %v453, %v454
    %v456 = vsel %vm118, %v436, 0.0
    %v457 = vrot.slane %v456, 4
    %v458 = vadd.f32 %v456, %v457
    %v459 = vrot.slane %v458, 2
    %v460 = vadd.f32 %v458, %v459
    %v461 = vrot.slane %v460, 1
    %v462 = vadd.f32 %v460, %v461
    %v463 = vsel %vm118, %v437, 0.0
    %v464 = vrot.slane %v463, 4
    %v465 = vadd.f32 %v463, %v464
    %v466 = vrot.slane %v465, 2
    %v467 = vadd.f32 %v465, %v466
    %v468 = vrot.slane %v467, 1
    %v469 = vadd.f32 %v467, %v468
    %v470 = vsel %vm118, %v438, 0.0
    %v471 = vrot.slane %v470, 4
    %v472 = vadd.f32 %v470, %v471
    %v473 = vrot.slane %v472, 2
    %v474 = vadd.f32 %v472, %v473
    %v475 = vrot.slane %v474, 1
    %v476 = vadd.f32 %v474, %v475
    %v477 = vsel %vm118, %v439, 0.0
    %v478 = vrot.slane %v477, 4
    %v479 = vadd.f32 %v477, %v478
    %v480 = vrot.slane %v479, 2
    %v481 = vadd.f32 %v479, %v480
    %v482 = vrot.slane %v481, 1
    %v483 = vadd.f32 %v481, %v482
    %v484 = vsel %vm118, %v440, 0.0
    %v485 = vrot.slane %v484, 4
    %v486 = vadd.f32 %v484, %v485
    %v487 = vrot.slane %v486, 2
    %v488 = vadd.f32 %v486, %v487
    %v489 = vrot.slane %v488, 1
    %v490 = vadd.f32 %v488, %v489
    %v491 = vsel %vm118, %v441, 0.0
    %v492 = vrot.slane %v491, 4
    %v493 = vadd.f32 %v491, %v492
    %v494 = vrot.slane %v493, 2
    %v495 = vadd.f32 %v493, %v494
    %v496 = vrot.slane %v495, 1
    %v497 = vadd.f32 %v495, %v496
    %v498 = vld [vmem:[#allocation5] sm:$0xf]
    %v499 = vpack.c.bf16 %v448, %v448
    %v500 = vpack.c.bf16 %v455, %v455
    %v501 = vpack.c.bf16 %v462, %v462
    %v502 = vpack.c.bf16 %v469, %v469
    %v503 = vpack.c.bf16 %v476, %v476
    %v504 = vpack.c.bf16 %v483, %v483
    %v505 = vpack.c.bf16 %v490, %v490
    %v506 = vpack.c.bf16 %v497, %v497
    %v515 = vunpack.c.l.b16 %v499
    %v516 = vunpack.c.l.b16 %v500
    %v517 = vunpack.c.l.b16 %v501
    %v518 = vunpack.c.l.b16 %v502
    %v519 = vunpack.c.l.b16 %v503
    %v520 = vunpack.c.l.b16 %v504
    %v521 = vunpack.c.l.b16 %v505
    %v522 = vunpack.c.l.b16 %v506
    %v523 = vsel %vm185, %v516, %v515
    %v524 = vsel %vm187, %v517, %v523
    %v525 = vsel %vm189, %v518, %v524
    %v526 = vsel %vm191, %v519, %v525
    %v527 = vsel %vm193, %v520, %v526
    %v528 = vsel %vm195, %v521, %v527
    %v529 = vsel %vm197, %v522, %v528
    %v530 = vpack.c.b16 %v529, %v529
    %vm531 = vcmask 1043456
    %v534 = vsel %vm531, %v498, %v530
    %v535 = vld [vmem:[#allocation7] sm:$0xf]
    %v536 = vld [vmem:[#allocation7 + $0x4] sm:$0xf]
    %v537 = vld [vmem:[#allocation7 + $0x8] sm:$0xf]
    %v538 = vld [vmem:[#allocation7 + $0xc] sm:$0xf]
    %v539 = vld [vmem:[%s4] sm:$0x1]
    %v541 = vlaneseq
    %v542 = vshrl.u32 %v541, 7
    %v543 = vsub.s32 0, %v542
    %v544 = vrot.slane %v539, %v543
    %v550 = vunpack.c.l.b16 %v535
    %v551 = vunpack.c.l.b16 %v536
    %v552 = vunpack.c.l.b16 %v537
    %v553 = vunpack.c.l.b16 %v538
    %v554 = vpack.c.b16 %v551, %v550
    %v555 = vpack.c.b16 %v553, %v552
    %v558 = vsel %vm118, %v534, 0
    %560 = vmatprep.subr.bf16.mxu0 0
    %561 = vmatpush1.bf16.msra.mxu0 %v554
    %562 = vmatprep.subr.bf16.mxu0 0
    %563 = vmatpush1.bf16.msra.mxu0 %v555
    %564 = vmatprep.subr.bf16.mxu0 0
    %565 = vmatpush1.bf16.msra.mxu0 0
    %566 = vmatprep.subr.bf16.mxu0 0
    %567 = vmatpush1.bf16.msra.mxu0 0
    %568 = vmatprep.subr.bf16.mxu0 0
    %569 = vmatpush1.bf16.msra.mxu0 0
    %570 = vmatprep.subr.bf16.mxu0 0
    %571 = vmatpush1.bf16.msra.mxu0 0
    %572 = vmatprep.subr.bf16.mxu0 0
    %573 = vmatpush1.bf16.msra.mxu0 0
    %574 = vmatprep.subr.bf16.mxu0 0
    %575 = vmatpush1.bf16.msra.mxu0 0
    %576 = vmatprep.subr.bf16.mxu0 0
    %577 = vmatpush1.bf16.msra.mxu0 0
    %578 = vmatprep.subr.bf16.mxu0 0
    %579 = vmatpush1.bf16.msra.mxu0 0
    %580 = vmatprep.subr.bf16.mxu0 0
    %581 = vmatpush1.bf16.msra.mxu0 0
    %582 = vmatprep.subr.bf16.mxu0 0
    %583 = vmatpush1.bf16.msra.mxu0 0
    %584 = vmatprep.subr.bf16.mxu0 0
    %585 = vmatpush1.bf16.msra.mxu0 0
    %586 = vmatprep.subr.bf16.mxu0 0
    %587 = vmatpush1.bf16.msra.mxu0 0
    %588 = vmatprep.subr.bf16.mxu0 0
    %589 = vmatpush1.bf16.msra.mxu0 0
    %590 = vmatprep.subr.bf16.mxu0 0
    %591 = vmatpush1.bf16.msra.mxu0 0
    %592 = vmatprep.mubr.bf16.mxu0 0
    %593 = vmatmul.mubr.bf16.gmra.mrb[0].mxu0 %v558
    %v594 = vpop.f32.mrb[0].mxu0
    %v595 = vadd.f32 %v544, %v594
    %v596 = vpop.f32.mrb[0].mxu0
    %v597 = vpop.f32.mrb[0].mxu0
    %v598 = vadd.f32 %v544, %v597
    %v599 = vpop.f32.mrb[0].mxu0
    %600 = vdwg.mxu0
    %v601 = vtanh.pop %v595
    %v602 = vpack.c.bf16 %v601, %v601
    %v603 = vld [vmem:[%s5] sm:$0xf]
    %v604 = vld [vmem:[%s5 + $0x4] sm:$0xf]
    %v605 = vld [vmem:[%s5 + $0x8] sm:$0xf]
    %v606 = vld [vmem:[%s5 + $0xc] sm:$0xf]
    %v607 = vld [vmem:[%s6] sm:$0x1]
    %v609 = vlaneseq
    %v610 = vshrl.u32 %v609, 7
    %v611 = vsub.s32 0, %v610
    %v612 = vrot.slane %v607, %v611
    %v618 = vunpack.c.l.b16 %v603
    %v619 = vunpack.c.l.b16 %v604
    %v620 = vunpack.c.l.b16 %v605
    %v621 = vunpack.c.l.b16 %v606
    %v622 = vpack.c.b16 %v619, %v618
    %v623 = vpack.c.b16 %v621, %v620
    %v627 = vsel %vm118, %v602, 0
    %629 = vmatprep.subr.bf16.mxu0 0
    %630 = vmatpush1.bf16.msra.mxu0 %v622
    %631 = vmatprep.subr.bf16.mxu0 0
    %632 = vmatpush1.bf16.msra.mxu0 %v623
    %633 = vmatprep.subr.bf16.mxu0 0
    %634 = vmatpush1.bf16.msra.mxu0 0
    %635 = vmatprep.subr.bf16.mxu0 0
    %636 = vmatpush1.bf16.msra.mxu0 0
    %637 = vmatprep.subr.bf16.mxu0 0
    %638 = vmatpush1.bf16.msra.mxu0 0
    %639 = vmatprep.subr.bf16.mxu0 0
    %640 = vmatpush1.bf16.msra.mxu0 0
    %641 = vmatprep.subr.bf16.mxu0 0
    %642 = vmatpush1.bf16.msra.mxu0 0
    %643 = vmatprep.subr.bf16.mxu0 0
    %644 = vmatpush1.bf16.msra.mxu0 0
    %645 = vmatprep.subr.bf16.mxu0 0
    %646 = vmatpush1.bf16.msra.mxu0 0
    %647 = vmatprep.subr.bf16.mxu0 0
    %648 = vmatpush1.bf16.msra.mxu0 0
    %649 = vmatprep.subr.bf16.mxu0 0
    %650 = vmatpush1.bf16.msra.mxu0 0
    %651 = vmatprep.subr.bf16.mxu0 0
    %652 = vmatpush1.bf16.msra.mxu0 0
    %653 = vmatprep.subr.bf16.mxu0 0
    %654 = vmatpush1.bf16.msra.mxu0 0
    %655 = vmatprep.subr.bf16.mxu0 0
    %656 = vmatpush1.bf16.msra.mxu0 0
    %657 = vmatprep.subr.bf16.mxu0 0
    %658 = vmatpush1.bf16.msra.mxu0 0
    %659 = vmatprep.subr.bf16.mxu0 0
    %660 = vmatpush1.bf16.msra.mxu0 0
    %661 = vmatprep.mubr.bf16.mxu0 0
    %662 = vmatmul.mubr.bf16.gmra.mrb[0].mxu0 %v627
    %v663 = vpop.f32.mrb[0].mxu0
    %v664 = vadd.f32 %v612, %v663
    %v665 = vpop.f32.mrb[0].mxu0
    %v666 = vpop.f32.mrb[0].mxu0
    %v667 = vpop.f32.mrb[0].mxu0
    %668 = vdwg.mxu0
    %670 = vrot.lane.b32.xlu0 %v664, 32
    %v671 = vpop.permute.xlu0 %670
    %v673 = vadd.f32 %v598, %v671
    %v674 = vxor.u32 %v673, 2147483648
    %v675 = vmul.f32 %v674, 1.442695
    %v676 = vpow.pop %v675
    %v677 = vadd.f32 %v676, 1.0
    %v678 = vrcp.pop %v677
    %v679 = vmul.f32 1.0, %v678
    %680 = vrot.lane.b32.xlu0 %v664, 96
    %v681 = vpop.permute.xlu0 %680
    %v683 = vmul.f32 %v679, %v681
    %685 = vrot.lane.b32.xlu0 %v683, 64
    %v686 = vpop.permute.xlu0 %685
    %v688 = vadd.f32 %v598, %v686
    %v689 = vtanh.pop %v688
    %v690 = vsub.f32 1.0, %v679
    %692 = vrot.lane.b32.xlu0 %v689, 96
    %v693 = vpop.permute.xlu0 %692
    %v695 = vmul.f32 %v690, %v693
    %697 = vrot.lane.b32.xlu0 %v601, 64
    %v698 = vpop.permute.xlu0 %697
    %v700 = vmul.f32 %v679, %v698
    %v701 = vadd.f32 %v695, %v700
    %v702 = vpack.c.bf16 %v701, %v701
    %v703 = vld [vmem:[#allocation8] sm:$0xf]
    %v704 = vld [vmem:[#allocation8 + $0x4] sm:$0xf]
    %v705 = vld [vmem:[#allocation8 + $0x8] sm:$0xf]
    %v706 = vld [vmem:[#allocation8 + $0xc] sm:$0xf]
    %v707 = vld [vmem:[%s8] sm:$0x1]
    %v709 = vlaneseq
    %v710 = vshrl.u32 %v709, 7
    %v711 = vsub.s32 0, %v710
    %v712 = vrot.slane %v707, %v711
    %715 = vrot.lane.b32.xlu0 %v702, 64
    %v716 = vpop.permute.xlu0 %715
    %v721 = vunpack.c.l.b16 %v703
    %v722 = vunpack.c.l.b16 %v704
    %v723 = vunpack.c.l.b16 %v705
    %v724 = vunpack.c.l.b16 %v706
    %v725 = vpack.c.b16 %v722, %v721
    %v726 = vpack.c.b16 %v724, %v723
    %v730 = vsel %vm118, %v716, 0
    %732 = vmatprep.subr.bf16.mxu0 0
    %733 = vmatpush1.bf16.msra.mxu0 %v725
    %734 = vmatprep.subr.bf16.mxu0 0
    %735 = vmatpush1.bf16.msra.mxu0 %v726
    %736 = vmatprep.subr.bf16.mxu0 0
    %737 = vmatpush1.bf16.msra.mxu0 0
    %738 = vmatprep.subr.bf16.mxu0 0
    %739 = vmatpush1.bf16.msra.mxu0 0
    %740 = vmatprep.subr.bf16.mxu0 0
    %741 = vmatpush1.bf16.msra.mxu0 0
    %742 = vmatprep.subr.bf16.mxu0 0
    %743 = vmatpush1.bf16.msra.mxu0 0
    %744 = vmatprep.subr.bf16.mxu0 0
    %745 = vmatpush1.bf16.msra.mxu0 0
    %746 = vmatprep.subr.bf16.mxu0 0
    %747 = vmatpush1.bf16.msra.mxu0 0
    %748 = vmatprep.subr.bf16.mxu0 0
    %749 = vmatpush1.bf16.msra.mxu0 0
    %750 = vmatprep.subr.bf16.mxu0 0
    %751 = vmatpush1.bf16.msra.mxu0 0
    %752 = vmatprep.subr.bf16.mxu0 0
    %753 = vmatpush1.bf16.msra.mxu0 0
    %754 = vmatprep.subr.bf16.mxu0 0
    %755 = vmatpush1.bf16.msra.mxu0 0
    %756 = vmatprep.subr.bf16.mxu0 0
    %757 = vmatpush1.bf16.msra.mxu0 0
    %758 = vmatprep.subr.bf16.mxu0 0
    %759 = vmatpush1.bf16.msra.mxu0 0
    %760 = vmatprep.subr.bf16.mxu0 0
    %761 = vmatpush1.bf16.msra.mxu0 0
    %762 = vmatprep.subr.bf16.mxu0 0
    %763 = vmatpush1.bf16.msra.mxu0 0
    %764 = vmatprep.mubr.bf16.mxu0 0
    %765 = vmatmul.mubr.bf16.gmra.mrb[0].mxu0 %v730
    %v766 = vpop.f32.mrb[0].mxu0
    %v767 = vadd.f32 %v712, %v766
    %v768 = vpop.f32.mrb[0].mxu0
    %v769 = vpop.f32.mrb[0].mxu0
    %v770 = vpop.f32.mrb[0].mxu0
    %771 = vdwg.mxu0
    %772 = vst [vmem:[#allocation10] sm:$0xff] %v767
    // Predicated region
    $region54: #{tpu_custom_call.1} parent=1 // pred_check
      _
    $region55: #{tpu_custom_call.1} parent=1 // pred_check_branch
      %774 = sbr.rel (0) target = $region57
    $region56: #{tpu_custom_call.1} parent=1 // pred_region
      %s776 = ssub.s32 128, 128
      %777 = vsyncadd [#allocation4], %s776
      %s779 = sshll.u32 [#allocation10], 4
      %s780 = int_to_ptr.vmem [resolvable:$true] %s779
      %782 = dma.vmem_to_hbm [thread:$0]  %s780, 128, %s9, [#allocation4]
    $region57: #{tpu_custom_call.1} parent=1 // pred_fallthru
      _
    // Predicated region
    $region58: #{tpu_custom_call.1} parent=1 // pred_check
      _
    $region59: #{tpu_custom_call.1} parent=1 // pred_check_branch
      %784 = sbr.rel (0) target = $region61
    $region60: #{tpu_custom_call.1} parent=1 // pred_region
      %785 = dma.done [#allocation4], 128
    $region61: #{tpu_custom_call.1} parent=1 // pred_fallthru
      _
    %786 = vsyncpa [#allocation3], 1
    %787 = vsyncpa [#allocation6], 1
    %788 = vsyncpa [#allocation9], 1
    %789 = vsyncpa [#allocation4], 1

</llo_original>
